<compile_context>
chip_gen: v6e
topology: v6e:2x2x1
jax: 0.10.0
libtpu: 0.0.40
codegen_flags: <defaults>
</compile_context>

<pallas_src>
import functools

import jax
import jax.numpy as jnp
from jax.experimental import pallas as pl
from jax.experimental.pallas import tpu as pltpu


# ----------------------------- config ("args") ------------------------------
class Args:
    n_pos = 4
    n_neg = 8
    neg_sampler = "random"   # Sampler actor
    loss1 = "listnet"        # only ListNet is implemented here
    temperature = 1.0
    rate = 0.005


# ----------------------------- Pallas kernel --------------------------------
def _listnet_kernel(ts_ref, o_ref, *, inv_temperature):
    # ts_ref: (2, L, TILE_B) bf16 — [teacher, student], list on sublanes,
    # batch on lanes.  All math in f32.
    t = ts_ref[0].astype(jnp.float32) * inv_temperature   # (L, TILE_B)
    s = ts_ref[1].astype(jnp.float32) * inv_temperature   # (L, TILE_B)

    # Teacher softmax over the list (axis=0 sublane reduction, XLU slot);
    # denominator kept unnormalized and folded in at the end via one EUP
    # approximate reciprocal.
    t_max = jnp.max(t, axis=0, keepdims=True)              # (1, TILE_B)
    e_t = jnp.exp(t - t_max)                                # (L, TILE_B)
    z_t = jnp.sum(e_t, axis=0, keepdims=True)               # (1, TILE_B)

    # Student log_softmax over the list.
    s_max = jnp.max(s, axis=0, keepdims=True)
    s_sh = s - s_max
    log_z = jnp.log(jnp.sum(jnp.exp(s_sh), axis=0, keepdims=True))
    log_sm_s = s_sh - log_z                                 # (L, TILE_B)

    # Per-example ListNet cross-entropy, lane-dense (1, TILE_B) output:
    #   -sum_j softmax(t)_j * log_softmax(s)_j
    #     = (1/Z_t) * sum_j e_t_j * (-log_sm_s_j)
    ce = jnp.sum(e_t * (-log_sm_s), axis=0, keepdims=True)
    # TODO(synk): if exact parity with the PyTorch reference is required,
    # switch approx=False (approx adds ~1e-3 relative error, fine for a loss).
    o_ref[...] = ce * pl.reciprocal(z_t, approx=True)


def _pick_tile_b(B, max_tile_b):
    # Big tiles amortize per-grid-step overhead; cap so the batch grid has
    # >= 2 tiles when the batch allows it (v7x: 2 TensorCores on the
    # "parallel" axis).  Minimum 128 lanes (vreg lane width).
    half = pl.cdiv(B, 2)
    tile = pl.cdiv(half, 128) * 128
    return max(128, min(int(max_tile_b), int(tile)))


def listnet_loss_pallas(ts_gathered, temperature, *, tile_b=None, max_tile_b=8192):
    """ListNet KD loss.

    ts_gathered: (2, L, B) stacked [teacher, student] gathered score lists,
    already in (list, batch) layout (list on sublanes, batch on lanes).
    `tile_b` is a tunable batch tile width (lanes); default auto-picks
    min(max_tile_b, roundup(B/2, 128)) so there are >= 2 parallel tiles.
    """
    two, L, B = ts_gathered.shape
    assert two == 2

    if tile_b is None:
        tile_b = _pick_tile_b(B, max_tile_b)
    b_pad = pl.cdiv(B, tile_b) * tile_b
    num_tiles = b_pad // tile_b

    # bf16 on the wire halves the dominant HBM read traffic (kernel is
    # zero-reuse, memory bound); padded batch lanes are zero-filled — they
    # produce finite losses and are excluded from the mean below.
    ts = ts_gathered.astype(jnp.bfloat16)
    ts = jnp.pad(ts, ((0, 0), (0, 0), (0, b_pad - B)))      # (2, L, B_pad)

    kernel = functools.partial(
        _listnet_kernel, inv_temperature=1.0 / float(temperature))

    per_example = pl.pallas_call(
        kernel,
        out_shape=jax.ShapeDtypeStruct((1, b_pad), jnp.float32),
        grid_spec=pltpu.PrefetchScalarGridSpec(
            num_scalar_prefetch=0,
            grid=(num_tiles,),
            in_specs=[
                # Single stacked input stream: one DMA / one sem per step.
                pl.BlockSpec((2, L, tile_b), lambda i: (0, 0, i)),
            ],
            out_specs=pl.BlockSpec((1, tile_b), lambda i: (0, i)),
        ),
        compiler_params=pltpu.CompilerParams(
            # Tiles are independent -> shardable across v7x's 2 TensorCores.
            dimension_semantics=("parallel",),
            # Footprint at tile_b=8192: bf16 input 2x(2*12*8192*2B)=768 KiB
            # double-buffered + ~1 MiB f32 temporaries — tiny on every gen.
            vmem_limit_bytes=32 << 20,
        ),
    )(ts)

    # TODO(synk): for extremely large B, emit per-tile partial sums (masking
    # padded lanes against the real B) instead of the (1, B_pad) vector; only
    # worth it if the epilogue mean shows up in the trace.
    return jnp.mean(per_example[0, :B])


# --------------------------- RankingLoss (JAX) -------------------------------
def sampler_random(neg_pool, num, key):
    # torch.randperm(samples.size(1))[:num].sort()[0] ; samples[:, ind]
    n = neg_pool.shape[1]
    ind = jnp.sort(jax.random.permutation(key, n)[:num])
    return neg_pool[:, ind]


def ranking_loss_forward(gt, t_score, s_score, args, key):
    # gt is 1-D -> sort teacher scores descending, pick pos/neg index lists.
    assert gt.ndim == 1
    sorted_ind = jnp.argsort(-t_score, axis=1)              # descending
    pos_list = sorted_ind[:, : args.n_pos]
    neg_pool = sorted_ind[:, args.n_pos:]
    neg_list = sampler_random(neg_pool, args.n_neg, key)    # deterministic key
    ind = jnp.concatenate([pos_list, neg_list], axis=1)     # (B, L = n_pos+n_neg)

    # Gather directly in (list, batch) layout — no separate transpose of the
    # gathered result is materialized in HBM.
    scores_t = jnp.swapaxes(jnp.stack([t_score, s_score]), 1, 2)   # (2, N, B)
    ts_gathered = jnp.take_along_axis(scores_t, ind.T[None], axis=1)  # (2, L, B)

    # hot path (loss) runs in the Pallas kernel
    # TODO(synk): other loss heads (stlistnet/listmle/lambda/margin_*/ranknet)
    # and the exp/zipfs samplers (torch.multinomial) were not provided in the
    # reference source; only ListNet + random sampling are implemented.
    return listnet_loss_pallas(ts_gathered, args.temperature)


# ----------------------------------- main ------------------------------------
if __name__ == "__main__":
    args = Args()
    B, N = 2, 32  # batch=2, candidate list length=32 (>= n_pos + n_neg)

    key = jax.random.PRNGKey(0)
    k_t, k_s, k_gt, k_samp = jax.random.split(key, 4)

    t_score = jax.random.normal(k_t, (B, N), dtype=jnp.float32)
    s_score = jax.random.normal(k_s, (B, N), dtype=jnp.float32)
    gt = jax.random.randint(k_gt, (B,), 0, N)               # 1-D ground-truth labels

    loss = ranking_loss_forward(gt, t_score, s_score, args, k_samp)
    loss = jax.block_until_ready(loss)

    # sanity check against a pure-JAX reference of the same computation,
    # quantizing the gathered scores to bf16 exactly as the kernel wrapper does
    sorted_ind = jnp.argsort(-t_score, axis=1)
    pos_list = sorted_ind[:, : args.n_pos]
    neg_pool = sorted_ind[:, args.n_pos:]
    ind_cols = jnp.sort(jax.random.permutation(k_samp, neg_pool.shape[1])[: args.n_neg])
    ind = jnp.concatenate([pos_list, neg_pool[:, ind_cols]], axis=1)
    t_g = jnp.take_along_axis(t_score, ind, axis=1)
    s_g = jnp.take_along_axis(s_score, ind, axis=1)
    t_q = t_g.astype(jnp.bfloat16).astype(jnp.float32) / args.temperature
    s_q = s_g.astype(jnp.bfloat16).astype(jnp.float32) / args.temperature
    ref = jnp.mean(
        -jnp.sum(jax.nn.softmax(t_q, -1) * jax.nn.log_softmax(s_q, -1), -1))
    # tolerance accounts for the EUP approximate reciprocal in the kernel
    assert jnp.allclose(loss, ref, atol=2e-3, rtol=2e-3), (loss, ref)

    print("KERNEL_OK")
</pallas_src>

<mosaic_0001>
module attributes {stable_mosaic.version = 11 : i64} {
  func.func @_listnet_kernel(%arg0: i32, %arg1: memref<2x12x128xbf16, #tpu.memory_space<vmem>>, %arg2: memref<1x128xf32, #tpu.memory_space<vmem>>) attributes {dimension_semantics = [#tpu.dimension_semantics<parallel>], iteration_bounds = array<i64: 1>, scalar_prefetch = 0 : i64, scratch_operands = 0 : i64, tpu.core_type = #tpu.core_type<tc>, window_params = [{transform_indices = @transform_0, window_bounds = array<i64: 2, 12, 128>}, {transform_indices = @transform_1, window_bounds = array<i64: 1, 128>}]} {
    %c0 = arith.constant 0 : index
    %c0_0 = arith.constant 0 : index
    %c0_1 = arith.constant 0 : index
    %0 = vector.load %arg1[%c0, %c0_0, %c0_1] : memref<2x12x128xbf16, #tpu.memory_space<vmem>>, vector<1x12x128xbf16>
    %1 = vector.shape_cast %0 : vector<1x12x128xbf16> to vector<12x128xbf16>
    %2 = arith.extf %1 : vector<12x128xbf16> to vector<12x128xf32>
    %cst = arith.constant 1.000000e+00 : f32
    %3 = vector.broadcast %cst : f32 to vector<12x128xf32>
    %4 = arith.mulf %2, %3 : vector<12x128xf32>
    %c1 = arith.constant 1 : index
    %c0_2 = arith.constant 0 : index
    %c0_3 = arith.constant 0 : index
    %5 = vector.load %arg1[%c1, %c0_2, %c0_3] : memref<2x12x128xbf16, #tpu.memory_space<vmem>>, vector<1x12x128xbf16>
    %6 = vector.shape_cast %5 : vector<1x12x128xbf16> to vector<12x128xbf16>
    %7 = arith.extf %6 : vector<12x128xbf16> to vector<12x128xf32>
    %cst_4 = arith.constant 1.000000e+00 : f32
    %8 = vector.broadcast %cst_4 : f32 to vector<12x128xf32>
    %9 = arith.mulf %7, %8 : vector<12x128xf32>
    %cst_5 = arith.constant dense<0xFF800000> : vector<128xf32>
    %10 = vector.multi_reduction <maximumf>, %4, %cst_5 [0] : vector<12x128xf32> to vector<128xf32>
    %11 = vector.shape_cast %10 : vector<128xf32> to vector<1x128xf32>
    %12 = vector.broadcast %11 : vector<1x128xf32> to vector<12x128xf32>
    %13 = arith.subf %4, %12 : vector<12x128xf32>
    %14 = math.exp %13 : vector<12x128xf32>
    %cst_6 = arith.constant dense<0.000000e+00> : vector<128xf32>
    %15 = vector.multi_reduction <add>, %14, %cst_6 [0] : vector<12x128xf32> to vector<128xf32>
    %16 = vector.shape_cast %15 : vector<128xf32> to vector<1x128xf32>
    %cst_7 = arith.constant dense<0xFF800000> : vector<128xf32>
    %17 = vector.multi_reduction <maximumf>, %9, %cst_7 [0] : vector<12x128xf32> to vector<128xf32>
    %18 = vector.shape_cast %17 : vector<128xf32> to vector<1x128xf32>
    %19 = vector.broadcast %18 : vector<1x128xf32> to vector<12x128xf32>
    %20 = arith.subf %9, %19 : vector<12x128xf32>
    %21 = math.exp %20 : vector<12x128xf32>
    %cst_8 = arith.constant dense<0.000000e+00> : vector<128xf32>
    %22 = vector.multi_reduction <add>, %21, %cst_8 [0] : vector<12x128xf32> to vector<128xf32>
    %23 = vector.shape_cast %22 : vector<128xf32> to vector<1x128xf32>
    %24 = math.log %23 : vector<1x128xf32>
    %25 = vector.broadcast %24 : vector<1x128xf32> to vector<12x128xf32>
    %26 = arith.subf %20, %25 : vector<12x128xf32>
    %cst_9 = arith.constant 0.000000e+00 : f32
    %27 = vector.broadcast %cst_9 : f32 to vector<12x128xf32>
    %28 = arith.subf %27, %26 : vector<12x128xf32>
    %29 = arith.mulf %14, %28 : vector<12x128xf32>
    %cst_10 = arith.constant dense<0.000000e+00> : vector<128xf32>
    %30 = vector.multi_reduction <add>, %29, %cst_10 [0] : vector<12x128xf32> to vector<128xf32>
    %31 = vector.shape_cast %30 : vector<128xf32> to vector<1x128xf32>
    %32 = tpu.reciprocal %16 {approx = true} : vector<1x128xf32> -> vector<1x128xf32>
    %33 = arith.mulf %31, %32 : vector<1x128xf32>
    %c0_11 = arith.constant 0 : index
    %c0_12 = arith.constant 0 : index
    %34 = vector.load %arg2[%c0_11, %c0_12] : memref<1x128xf32, #tpu.memory_space<vmem>>, vector<1x128xf32>
    tpu.vector_store %arg2[%c0_11, %c0_12], %33 {strides = array<i32>} : memref<1x128xf32, #tpu.memory_space<vmem>>, vector<1x128xf32>,
    return
  }
  func.func @transform_0(%arg0: i32) -> (i32, i32, i32) {
    %c0_i32 = arith.constant 0 : i32
    %c0_i32_0 = arith.constant 0 : i32
    %c0_i32_1 = arith.constant 0 : i32
    return %c0_i32, %c0_i32_0, %arg0 : i32, i32, i32
  }
  func.func @transform_1(%arg0: i32) -> (i32, i32) {
    %c0_i32 = arith.constant 0 : i32
    %c0_i32_0 = arith.constant 0 : i32
    return %c0_i32, %arg0 : i32, i32
  }
}

</mosaic_0001>

<llo_original>
// kernel: tpu_custom_call.1
$region0: #{tpu_custom_call.1}
  #allocation0 [shape = 'u32[]', space=smem, size = 0x4, offset = 0x4, fixed_abs, tag = 'smem constant byte address 0x4 - core index']
  #allocation1 [shape = 'u32[144,128]{1,0:T(1,128)}', space=vmem, size = 0x12000, scoped, tag = 'internal scratch']
  %s0 = inlined_call_operand.vmem [shape: bf16[2,12,128], index: 0, kind: input, shape index: {}]
  %s1 = inlined_call_operand.hbm [shape: f32[1,128], index: 1, kind: output, shape index: {}]
  %s2 = sld [smem:[#allocation0]]
  $region14: #{tpu_custom_call.1} parent=0
    _
  %s4 = ssub.s32 1, %s2
  %s5 = scalar_select 0, %s4, %s2
  $region1: #{tpu_custom_call.1} parent=0
    #allocation2 [shape = 'u8[512]{0}', space=vmem, size = 0x400, scoped, tag = 'output window, operand 0, single buffered']
    #allocation3 [shape = 's32[1]{0}', space=sflag, size = 0x4, scoped, tag = 'scoped memory for tpu_custom_call.1']
    %6 = vsyncpa [#allocation3], 0
    // Predicated region
    $region2: #{tpu_custom_call.1} parent=1 // pred_check
      _
    $region3: #{tpu_custom_call.1} parent=1 // pred_check_branch
      %8 = sbr.rel (0) target = $region5
    $region4: #{tpu_custom_call.1} parent=1 // pred_region
      _
    $region5: #{tpu_custom_call.1} parent=1 // pred_fallthru
      _
    %v9 = vld [vmem:[%s0] sm:$0xf]
    %v10 = vld [vmem:[%s0 + $0x4] sm:$0x3]
    %v11 = vunpack.c.l.bf16 %v9
    %v12 = vunpack.c.l.bf16 %v10
    %s13 = scalar_lea.vmem %s0, 8
    %v14 = vld [vmem:[%s13] sm:$0xf]
    %v15 = vld [vmem:[%s13 + $0x4] sm:$0x3]
    %v16 = vunpack.c.l.bf16 %v14
    %v17 = vunpack.c.l.bf16 %v15
    %vm18 = vcmask 1043456
    %v19 = vsel %vm18, %v12, -inf
    %v20 = vmax.f32 %v11, %v19
    %v21 = vrot.slane %v20, 4
    %v22 = vmax.f32 %v20, %v21
    %v23 = vrot.slane %v22, 2
    %v24 = vmax.f32 %v22, %v23
    %v25 = vrot.slane %v24, 1
    %v26 = vmax.f32 %v24, %v25
    %v27 = vsub.f32 %v11, %v26
    %v28 = vsub.f32 %v12, %v26
    %v29 = vmul.f32 %v27, 1.442695
    %v30 = vpow.pop %v29
    %v31 = vmul.f32 %v28, 1.442695
    %v32 = vpow.pop %v31
    %v33 = vsel %vm18, %v32, 0.0
    %v34 = vadd.f32 %v30, %v33
    %v35 = vrot.slane %v34, 4
    %v36 = vadd.f32 %v34, %v35
    %v37 = vrot.slane %v36, 2
    %v38 = vadd.f32 %v36, %v37
    %v39 = vrot.slane %v38, 1
    %v40 = vadd.f32 %v38, %v39
    %v41 = vsel %vm18, %v17, -inf
    %v42 = vmax.f32 %v16, %v41
    %v43 = vrot.slane %v42, 4
    %v44 = vmax.f32 %v42, %v43
    %v45 = vrot.slane %v44, 2
    %v46 = vmax.f32 %v44, %v45
    %v47 = vrot.slane %v46, 1
    %v48 = vmax.f32 %v46, %v47
    %v49 = vsub.f32 %v16, %v48
    %v50 = vsub.f32 %v17, %v48
    %v51 = vmul.f32 %v49, 1.442695
    %v52 = vpow.pop %v51
    %v53 = vmul.f32 %v50, 1.442695
    %v54 = vpow.pop %v53
    %v55 = vsel %vm18, %v54, 0.0
    %v56 = vadd.f32 %v52, %v55
    %v57 = vrot.slane %v56, 4
    %v58 = vadd.f32 %v56, %v57
    %v59 = vrot.slane %v58, 2
    %v60 = vadd.f32 %v58, %v59
    %v61 = vrot.slane %v60, 1
    %v62 = vadd.f32 %v60, %v61
    %v63 = vlog2.pop %v62
    %v64 = vmul.f32 %v63, 0.6931472
    %v65 = vsub.f32 %v49, %v64
    %v66 = vsub.f32 %v50, %v64
    %v67 = vsub.f32 0.0, %v65
    %v68 = vsub.f32 0.0, %v66
    %v69 = vmul.f32 %v30, %v67
    %v70 = vmul.f32 %v32, %v68
    %v71 = vsel %vm18, %v70, 0.0
    %v72 = vadd.f32 %v69, %v71
    %v73 = vrot.slane %v72, 4
    %v74 = vadd.f32 %v72, %v73
    %v75 = vrot.slane %v74, 2
    %v76 = vadd.f32 %v74, %v75
    %v77 = vrot.slane %v76, 1
    %v78 = vadd.f32 %v76, %v77
    %v79 = vrcp.pop %v40
    %v80 = vmul.f32 %v78, %v79
    %81 = vst [vmem:[#allocation2] sm:$0x1] %v80
    // Predicated region
    $region6: #{tpu_custom_call.1} parent=1 // pred_check
      _
    $region7: #{tpu_custom_call.1} parent=1 // pred_check_branch
      %83 = sbr.rel (0) target = $region9
    $region8: #{tpu_custom_call.1} parent=1 // pred_region
      %s85 = ssub.s32 16, 16
      %86 = vsyncadd [#allocation3], %s85
      %s88 = sshll.u32 [#allocation2], 4
      %s89 = int_to_ptr.vmem [resolvable:$true] %s88
      %91 = dma.vmem_to_hbm [thread:$0]  %s89, 16, %s1, [#allocation3]
    $region9: #{tpu_custom_call.1} parent=1 // pred_fallthru
      _
    // Predicated region
    $region10: #{tpu_custom_call.1} parent=1 // pred_check
      _
    $region11: #{tpu_custom_call.1} parent=1 // pred_check_branch
      %93 = sbr.rel (0) target = $region13
    $region12: #{tpu_custom_call.1} parent=1 // pred_region
      %94 = dma.done [#allocation3], 16
    $region13: #{tpu_custom_call.1} parent=1 // pred_fallthru
      _
    %95 = vsyncpa [#allocation3], 1

</llo_original>
